<compile_context>
chip_gen: v7x
topology: tpu7x:2x2x1
jax: 0.10.0
libtpu: 0.0.40
codegen_flags: <defaults>
</compile_context>

<pallas_src>
import functools

import jax
import jax.numpy as jnp
from jax.experimental import pallas as pl
from jax.experimental.pallas import tpu as pltpu

# Dropout rates (same globals the d2l script uses).
DROPOUT1 = 0.2
DROPOUT2 = 0.5
LANE = 128
SUBLANE = 8


def _round_up(n, m):
    return (n + m - 1) // m * m


def mlp_kernel(*refs, training):
    if training:
        (x_ref, w1_ref, b1_ref, n1_ref, w2_ref, b2_ref, n2_ref,
         w3_ref, b3_ref, out_ref) = refs
    else:
        (x_ref, w1_ref, b1_ref, w2_ref, b2_ref, w3_ref, b3_ref,
         out_ref) = refs
        n1_ref = n2_ref = None

    # lin1 + ReLU   (bf16 x bf16 -> f32 accumulation on the MXU)
    h1 = jnp.dot(x_ref[...], w1_ref[...],
                 preferred_element_type=jnp.float32) + b1_ref[...]
    h1 = jnp.maximum(h1, 0.0)
    if training:
        # d2l dropout_layer mask: (randn > p). The 1/(1-p) rescale is folded
        # into w2 on the host.
        h1 = jnp.where(n1_ref[...] > DROPOUT1, h1, 0.0)

    # lin2 + ReLU
    h2 = jnp.dot(h1.astype(w2_ref.dtype), w2_ref[...],
                 preferred_element_type=jnp.float32) + b2_ref[...]
    h2 = jnp.maximum(h2, 0.0)
    if training:
        h2 = jnp.where(n2_ref[...] > DROPOUT2, h2, 0.0)

    # lin3 (no activation); output columns are lane-dense (padded to 128).
    out = jnp.dot(h2.astype(w3_ref.dtype), w3_ref[...],
                  preferred_element_type=jnp.float32) + b3_ref[...]
    out_ref[...] = out.astype(out_ref.dtype)


def net_forward(x, params, noise1=None, noise2=None, *, training=True,
                tile_b_max=128):
    """Fused forward of Net. x: (B, num_inputs) f32 -> (B, num_outputs) f32."""
    w1, b1, w2, b2, w3, b3 = params          # weights stored (in, out), f32
    batch, num_inputs = x.shape
    num_h1 = w1.shape[1]
    num_h2 = w2.shape[1]
    num_outputs = w3.shape[1]

    if training:
        # Fold the 1/(1-p) dropout rescale into the following weight matrix.
        w2 = w2 * (1.0 / (1.0 - DROPOUT1))
        w3 = w3 * (1.0 / (1.0 - DROPOUT2))

    # Pad output features up to a multiple of 128 lanes (unmasked vst); the
    # padded columns are zero and get sliced off after the call.
    out_pad = _round_up(num_outputs, LANE)
    if out_pad != num_outputs:
        w3 = jnp.pad(w3, ((0, 0), (0, out_pad - num_outputs)))
        b3 = jnp.pad(b3, ((0, 0), (0, out_pad - num_outputs)))

    # bf16 activations / weights, f32 accumulation; biases & output stay f32.
    w1, w2, w3 = (w.astype(jnp.bfloat16) for w in (w1, w2, w3))
    x = x.astype(jnp.bfloat16)

    # Batch tiling: pad only to a sublane multiple, split into near-equal
    # tiles (<= tile_b_max) -> minimal padded compute per grid step.
    b8 = _round_up(batch, SUBLANE)
    n_tiles = pl.cdiv(b8, tile_b_max)
    tile_b = _round_up(pl.cdiv(b8, n_tiles), SUBLANE)
    b_pad = tile_b * n_tiles
    if b_pad != batch:
        x = jnp.pad(x, ((0, b_pad - batch), (0, 0)))
    grid = (n_tiles,)

    def batch_spec(feat):
        return pl.BlockSpec((tile_b, feat), lambda i: (i, 0))

    def pinned_spec(arr):
        return pl.BlockSpec(arr.shape, lambda i: (0, 0))

    args = [x, w1, b1]
    in_specs = [batch_spec(num_inputs), pinned_spec(w1), pinned_spec(b1)]
    noise_bytes = 0
    if training:
        noise1 = noise1.astype(jnp.bfloat16)
        noise2 = noise2.astype(jnp.bfloat16)
        if b_pad != batch:
            noise1 = jnp.pad(noise1, ((0, b_pad - batch), (0, 0)))
            noise2 = jnp.pad(noise2, ((0, b_pad - batch), (0, 0)))
        args += [noise1, w2, b2, noise2, w3, b3]
        in_specs += [batch_spec(num_h1), pinned_spec(w2), pinned_spec(b2),
                     batch_spec(num_h2), pinned_spec(w3), pinned_spec(b3)]
        noise_bytes = noise1.size * 2 + noise2.size * 2
    else:
        args += [w2, b2, w3, b3]
        in_specs += [pinned_spec(w2), pinned_spec(b2),
                     pinned_spec(w3), pinned_spec(b3)]

    flops = 2 * b_pad * (num_inputs * num_h1 + num_h1 * num_h2
                         + num_h2 * out_pad)
    bytes_accessed = (x.size * 2 + (w1.size + w2.size + w3.size) * 2
                      + (b1.size + b2.size + b3.size) * 4
                      + noise_bytes + b_pad * out_pad * 4)

    out = pl.pallas_call(
        functools.partial(mlp_kernel, training=training),
        out_shape=jax.ShapeDtypeStruct((b_pad, out_pad), jnp.float32),
        grid=grid,
        in_specs=in_specs,
        out_specs=pl.BlockSpec((tile_b, out_pad), lambda i: (i, 0)),
        compiler_params=pltpu.CompilerParams(
            dimension_semantics=("parallel",)),
        cost_estimate=pl.CostEstimate(flops=flops, transcendentals=0,
                                      bytes_accessed=bytes_accessed),
    )(*args)

    return out[:batch, :num_outputs]


def init_params(key, num_inputs, num_outputs, num_hiddens1, num_hiddens2):
    """Deterministic synthetic init (PyTorch-like uniform fan-in bound)."""
    ks = jax.random.split(key, 6)

    def lin(kw, kb, fan_in, fan_out):
        bound = 1.0 / jnp.sqrt(fan_in)
        # stored already transposed: (in, out)
        w = jax.random.uniform(kw, (fan_in, fan_out), jnp.float32, -bound, bound)
        b = jax.random.uniform(kb, (1, fan_out), jnp.float32, -bound, bound)
        return w, b

    w1, b1 = lin(ks[0], ks[1], num_inputs, num_hiddens1)
    w2, b2 = lin(ks[2], ks[3], num_hiddens1, num_hiddens2)
    w3, b3 = lin(ks[4], ks[5], num_hiddens2, num_outputs)
    return (w1, b1, w2, b2, w3, b3)


if __name__ == "__main__":
    # Small shapes consistent with the module (d2l uses 784/256/256/10).
    # B=200 deliberately exercises the batch-padding / multi-tile path
    # (b_pad=208, 2 grid steps of 104 rows).
    B, NUM_INPUTS, NUM_H1, NUM_H2, NUM_OUTPUTS = 200, 256, 128, 128, 10

    root = jax.random.PRNGKey(0)
    k_x, k_p, k_n1, k_n2 = jax.random.split(root, 4)

    x = jax.random.normal(k_x, (B, NUM_INPUTS), jnp.float32)
    params = init_params(k_p, NUM_INPUTS, NUM_OUTPUTS, NUM_H1, NUM_H2)

    # TODO(synk): torch.randn inside dropout_layer is sampled host-side with
    # jax.random.normal (no torch bit-compat); in-kernel pltpu.prng_* noise
    # would save the two noise DMAs but makes the mask unverifiable vs the ref.
    noise1 = jax.random.normal(k_n1, (B, NUM_H1), jnp.float32)
    noise2 = jax.random.normal(k_n2, (B, NUM_H2), jnp.float32)

    out = net_forward(x, params, noise1, noise2, training=True)
    jax.block_until_ready(out)
    assert out.shape == (B, NUM_OUTPUTS) and out.dtype == jnp.float32

    # Pure-JAX reference with identical numerics (bf16 inputs, f32 accum,
    # dropout rescale folded into the next weight) -> tight tolerance.
    w1, b1, w2, b2, w3, b3 = params
    xb = x.astype(jnp.bfloat16)
    w1b = w1.astype(jnp.bfloat16)
    w2b = (w2 * (1.0 / (1.0 - DROPOUT1))).astype(jnp.bfloat16)
    w3b = (w3 * (1.0 / (1.0 - DROPOUT2))).astype(jnp.bfloat16)
    n1b = noise1.astype(jnp.bfloat16)
    n2b = noise2.astype(jnp.bfloat16)
    h1 = jnp.maximum(jnp.dot(xb, w1b, preferred_element_type=jnp.float32) + b1, 0.0)
    h1 = jnp.where(n1b > DROPOUT1, h1, 0.0)
    h2 = jnp.maximum(jnp.dot(h1.astype(jnp.bfloat16), w2b,
                             preferred_element_type=jnp.float32) + b2, 0.0)
    h2 = jnp.where(n2b > DROPOUT2, h2, 0.0)
    ref = jnp.dot(h2.astype(jnp.bfloat16), w3b,
                  preferred_element_type=jnp.float32) + b3
    assert jnp.allclose(out, ref, atol=2e-3, rtol=2e-3), float(
        jnp.max(jnp.abs(out - ref)))

    # Eval mode: noise tensors are not passed / DMA'd and no dropout applied.
    out_eval = net_forward(x, params, training=False)
    jax.block_until_ready(out_eval)
    w2e = w2.astype(jnp.bfloat16)
    w3e = w3.astype(jnp.bfloat16)
    h1e = jnp.maximum(jnp.dot(xb, w1b, preferred_element_type=jnp.float32) + b1, 0.0)
    h2e = jnp.maximum(jnp.dot(h1e.astype(jnp.bfloat16), w2e,
                              preferred_element_type=jnp.float32) + b2, 0.0)
    ref_eval = jnp.dot(h2e.astype(jnp.bfloat16), w3e,
                       preferred_element_type=jnp.float32) + b3
    assert jnp.allclose(out_eval, ref_eval, atol=2e-3, rtol=2e-3), float(
        jnp.max(jnp.abs(out_eval - ref_eval)))

    print("KERNEL_OK")
</pallas_src>

<mosaic_0001>
module attributes {stable_mosaic.version = 11 : i64} {
  func.func @mlp_kernel(%arg0: i32, %arg1: memref<104x256xbf16, #tpu.memory_space<vmem>>, %arg2: memref<256x128xbf16, #tpu.memory_space<vmem>>, %arg3: memref<1x128xf32, #tpu.memory_space<vmem>>, %arg4: memref<104x128xbf16, #tpu.memory_space<vmem>>, %arg5: memref<128x128xbf16, #tpu.memory_space<vmem>>, %arg6: memref<1x128xf32, #tpu.memory_space<vmem>>, %arg7: memref<104x128xbf16, #tpu.memory_space<vmem>>, %arg8: memref<128x128xbf16, #tpu.memory_space<vmem>>, %arg9: memref<1x128xf32, #tpu.memory_space<vmem>>, %arg10: memref<104x128xf32, #tpu.memory_space<vmem>>) attributes {dimension_semantics = [#tpu.dimension_semantics<parallel>], iteration_bounds = array<i64: 2>, scalar_prefetch = 0 : i64, scratch_operands = 0 : i64, tpu.core_type = #tpu.core_type<tc>, window_params = [{transform_indices = @transform_0, window_bounds = array<i64: 104, 256>}, {pipeline_mode = #tpu.pipeline_mode<synchronous>, transform_indices = @transform_1, window_bounds = array<i64: 256, 128>}, {pipeline_mode = #tpu.pipeline_mode<synchronous>, transform_indices = @transform_2, window_bounds = array<i64: 1, 128>}, {transform_indices = @transform_3, window_bounds = array<i64: 104, 128>}, {pipeline_mode = #tpu.pipeline_mode<synchronous>, transform_indices = @transform_4, window_bounds = array<i64: 128, 128>}, {pipeline_mode = #tpu.pipeline_mode<synchronous>, transform_indices = @transform_5, window_bounds = array<i64: 1, 128>}, {transform_indices = @transform_6, window_bounds = array<i64: 104, 128>}, {pipeline_mode = #tpu.pipeline_mode<synchronous>, transform_indices = @transform_7, window_bounds = array<i64: 128, 128>}, {pipeline_mode = #tpu.pipeline_mode<synchronous>, transform_indices = @transform_8, window_bounds = array<i64: 1, 128>}, {transform_indices = @transform_9, window_bounds = array<i64: 104, 128>}]} {
    %c0 = arith.constant 0 : index
    %c0_0 = arith.constant 0 : index
    %0 = vector.load %arg1[%c0, %c0_0] : memref<104x256xbf16, #tpu.memory_space<vmem>>, vector<104x256xbf16>
    %c0_1 = arith.constant 0 : index
    %c0_2 = arith.constant 0 : index
    %1 = vector.load %arg2[%c0_1, %c0_2] : memref<256x128xbf16, #tpu.memory_space<vmem>>, vector<256x128xbf16>
    %cst = arith.constant dense<0.000000e+00> : vector<104x128xf32>
    %2 = tpu.matmul %0, %1, %cst {dimension_numbers = #tpu.dot_dimension_numbers<[1], [0], [0], [1], [0, 0, 1, 1], [], []>} : vector<104x256xbf16>, vector<256x128xbf16>, vector<104x128xf32> -> vector<104x128xf32>
    %c0_3 = arith.constant 0 : index
    %c0_4 = arith.constant 0 : index
    %3 = vector.load %arg3[%c0_3, %c0_4] : memref<1x128xf32, #tpu.memory_space<vmem>>, vector<1x128xf32>
    %4 = vector.broadcast %3 : vector<1x128xf32> to vector<104x128xf32>
    %5 = arith.addf %2, %4 : vector<104x128xf32>
    %cst_5 = arith.constant 0.000000e+00 : f32
    %6 = vector.broadcast %cst_5 : f32 to vector<104x128xf32>
    %7 = arith.maximumf %5, %6 : vector<104x128xf32>
    %c0_6 = arith.constant 0 : index
    %c0_7 = arith.constant 0 : index
    %8 = vector.load %arg4[%c0_6, %c0_7] : memref<104x128xbf16, #tpu.memory_space<vmem>>, vector<104x128xbf16>
    %cst_8 = arith.constant 2.001950e-01 : bf16
    %9 = vector.broadcast %cst_8 : bf16 to vector<104x128xbf16>
    %10 = arith.cmpf ogt, %8, %9 : vector<104x128xbf16>
    %cst_9 = arith.constant 0.000000e+00 : f32
    %11 = vector.broadcast %cst_9 : f32 to vector<104x128xf32>
    %12 = arith.select %10, %7, %11 : vector<104x128xi1>, vector<104x128xf32>
    %13 = arith.truncf %12 : vector<104x128xf32> to vector<104x128xbf16>
    %c0_10 = arith.constant 0 : index
    %c0_11 = arith.constant 0 : index
    %14 = vector.load %arg5[%c0_10, %c0_11] : memref<128x128xbf16, #tpu.memory_space<vmem>>, vector<128x128xbf16>
    %cst_12 = arith.constant dense<0.000000e+00> : vector<104x128xf32>
    %15 = tpu.matmul %13, %14, %cst_12 {dimension_numbers = #tpu.dot_dimension_numbers<[1], [0], [0], [1], [0, 0, 1, 1], [], []>} : vector<104x128xbf16>, vector<128x128xbf16>, vector<104x128xf32> -> vector<104x128xf32>
    %c0_13 = arith.constant 0 : index
    %c0_14 = arith.constant 0 : index
    %16 = vector.load %arg6[%c0_13, %c0_14] : memref<1x128xf32, #tpu.memory_space<vmem>>, vector<1x128xf32>
    %17 = vector.broadcast %16 : vector<1x128xf32> to vector<104x128xf32>
    %18 = arith.addf %15, %17 : vector<104x128xf32>
    %cst_15 = arith.constant 0.000000e+00 : f32
    %19 = vector.broadcast %cst_15 : f32 to vector<104x128xf32>
    %20 = arith.maximumf %18, %19 : vector<104x128xf32>
    %c0_16 = arith.constant 0 : index
    %c0_17 = arith.constant 0 : index
    %21 = vector.load %arg7[%c0_16, %c0_17] : memref<104x128xbf16, #tpu.memory_space<vmem>>, vector<104x128xbf16>
    %cst_18 = arith.constant 5.000000e-01 : bf16
    %22 = vector.broadcast %cst_18 : bf16 to vector<104x128xbf16>
    %23 = arith.cmpf ogt, %21, %22 : vector<104x128xbf16>
    %cst_19 = arith.constant 0.000000e+00 : f32
    %24 = vector.broadcast %cst_19 : f32 to vector<104x128xf32>
    %25 = arith.select %23, %20, %24 : vector<104x128xi1>, vector<104x128xf32>
    %26 = arith.truncf %25 : vector<104x128xf32> to vector<104x128xbf16>
    %c0_20 = arith.constant 0 : index
    %c0_21 = arith.constant 0 : index
    %27 = vector.load %arg8[%c0_20, %c0_21] : memref<128x128xbf16, #tpu.memory_space<vmem>>, vector<128x128xbf16>
    %cst_22 = arith.constant dense<0.000000e+00> : vector<104x128xf32>
    %28 = tpu.matmul %26, %27, %cst_22 {dimension_numbers = #tpu.dot_dimension_numbers<[1], [0], [0], [1], [0, 0, 1, 1], [], []>} : vector<104x128xbf16>, vector<128x128xbf16>, vector<104x128xf32> -> vector<104x128xf32>
    %c0_23 = arith.constant 0 : index
    %c0_24 = arith.constant 0 : index
    %29 = vector.load %arg9[%c0_23, %c0_24] : memref<1x128xf32, #tpu.memory_space<vmem>>, vector<1x128xf32>
    %30 = vector.broadcast %29 : vector<1x128xf32> to vector<104x128xf32>
    %31 = arith.addf %28, %30 : vector<104x128xf32>
    %c0_25 = arith.constant 0 : index
    %c0_26 = arith.constant 0 : index
    %32 = vector.load %arg10[%c0_25, %c0_26] : memref<104x128xf32, #tpu.memory_space<vmem>>, vector<104x128xf32>
    tpu.vector_store %arg10[%c0_25, %c0_26], %31 {strides = array<i32>} : memref<104x128xf32, #tpu.memory_space<vmem>>, vector<104x128xf32>,
    return
  }
  func.func @transform_0(%arg0: i32) -> (i32, i32) {
    %c0_i32 = arith.constant 0 : i32
    %c0_i32_0 = arith.constant 0 : i32
    return %arg0, %c0_i32 : i32, i32
  }
  func.func @transform_1(%arg0: i32) -> (i32, i32) {
    %c0_i32 = arith.constant 0 : i32
    %c0_i32_0 = arith.constant 0 : i32
    %c0_i32_1 = arith.constant 0 : i32
    return %c0_i32, %c0_i32_0 : i32, i32
  }
  func.func @transform_2(%arg0: i32) -> (i32, i32) {
    %c0_i32 = arith.constant 0 : i32
    %c0_i32_0 = arith.constant 0 : i32
    %c0_i32_1 = arith.constant 0 : i32
    return %c0_i32, %c0_i32_0 : i32, i32
  }
  func.func @transform_3(%arg0: i32) -> (i32, i32) {
    %c0_i32 = arith.constant 0 : i32
    %c0_i32_0 = arith.constant 0 : i32
    return %arg0, %c0_i32 : i32, i32
  }
  func.func @transform_4(%arg0: i32) -> (i32, i32) {
    %c0_i32 = arith.constant 0 : i32
    %c0_i32_0 = arith.constant 0 : i32
    %c0_i32_1 = arith.constant 0 : i32
    return %c0_i32, %c0_i32_0 : i32, i32
  }
  func.func @transform_5(%arg0: i32) -> (i32, i32) {
    %c0_i32 = arith.constant 0 : i32
    %c0_i32_0 = arith.constant 0 : i32
    %c0_i32_1 = arith.constant 0 : i32
    return %c0_i32, %c0_i32_0 : i32, i32
  }
  func.func @transform_6(%arg0: i32) -> (i32, i32) {
    %c0_i32 = arith.constant 0 : i32
    %c0_i32_0 = arith.constant 0 : i32
    return %arg0, %c0_i32 : i32, i32
  }
  func.func @transform_7(%arg0: i32) -> (i32, i32) {
    %c0_i32 = arith.constant 0 : i32
    %c0_i32_0 = arith.constant 0 : i32
    %c0_i32_1 = arith.constant 0 : i32
    return %c0_i32, %c0_i32_0 : i32, i32
  }
  func.func @transform_8(%arg0: i32) -> (i32, i32) {
    %c0_i32 = arith.constant 0 : i32
    %c0_i32_0 = arith.constant 0 : i32
    %c0_i32_1 = arith.constant 0 : i32
    return %c0_i32, %c0_i32_0 : i32, i32
  }
  func.func @transform_9(%arg0: i32) -> (i32, i32) {
    %c0_i32 = arith.constant 0 : i32
    %c0_i32_0 = arith.constant 0 : i32
    return %arg0, %c0_i32 : i32, i32
  }
}

</mosaic_0001>

<llo_original>
// kernel: tpu_custom_call.1
$region0: #{tpu_custom_call.1}
  #allocation0 [shape = 'u32[]', space=smem, size = 0x4, offset = 0x4, fixed_abs, tag = 'smem constant byte address 0x4 - core index']
  #allocation1 [shape = 'u32[144,128]{1,0:T(1,128)}', space=vmem, size = 0x12000, scoped, tag = 'internal scratch']
  %s0 = inlined_call_operand.hbm [shape: bf16[208,256], index: 0, kind: input, shape index: {}]
  %s1 = inlined_call_operand.hbm [shape: bf16[256,128], index: 1, kind: input, shape index: {}]
  %s2 = inlined_call_operand.vmem [shape: f32[1,128], index: 2, kind: input, shape index: {}]
  %s3 = inlined_call_operand.hbm [shape: bf16[208,128], index: 3, kind: input, shape index: {}]
  %s4 = inlined_call_operand.hbm [shape: bf16[128,128], index: 4, kind: input, shape index: {}]
  %s5 = inlined_call_operand.vmem [shape: f32[1,128], index: 5, kind: input, shape index: {}]
  %s6 = inlined_call_operand.hbm [shape: bf16[208,128], index: 6, kind: input, shape index: {}]
  %s7 = inlined_call_operand.hbm [shape: bf16[128,128], index: 7, kind: input, shape index: {}]
  %s8 = inlined_call_operand.vmem [shape: f32[1,128], index: 8, kind: input, shape index: {}]
  %s9 = inlined_call_operand.hbm [shape: f32[208,128], index: 9, kind: output, shape index: {}]
  %s10 = sld [smem:[#allocation0]]
  $region93: #{tpu_custom_call.1} parent=0
    _
  %s12 = ssub.s32 1, %s10
  %s13 = scalar_select 0, %s12, %s10
  $region1: #{tpu_custom_call.1} parent=0
    #allocation2 [shape = 'u8[106496]{0}', space=vmem, size = 0x1a000, scoped, tag = 'input window, operand 0']
    #allocation3 [shape = 's32[2]{0}', space=sflag, size = 0x8, scoped, tag = 'scoped memory for tpu_custom_call.1']
    #allocation4 [shape = 's32[2]{0}', space=sflag, size = 0x8, scoped, tag = 'scoped memory for tpu_custom_call.1']
    #allocation5 [shape = 'u8[65536]{0}', space=vmem, size = 0x10000, scoped, tag = 'input window, operand 1, single buffered']
    #allocation6 [shape = 's32[1]{0}', space=sflag, size = 0x4, scoped, tag = 'scoped memory for tpu_custom_call.1']
    #allocation7 [shape = 'u8[53248]{0}', space=vmem, size = 0xd000, scoped, tag = 'input window, operand 3']
    #allocation8 [shape = 'u8[32768]{0}', space=vmem, size = 0x8000, scoped, tag = 'input window, operand 4, single buffered']
    #allocation9 [shape = 'u8[53248]{0}', space=vmem, size = 0xd000, scoped, tag = 'input window, operand 6']
    #allocation10 [shape = 's32[2]{0}', space=sflag, size = 0x8, scoped, tag = 'scoped memory for tpu_custom_call.1']
    #allocation11 [shape = 'u8[32768]{0}', space=vmem, size = 0x8000, scoped, tag = 'input window, operand 7, single buffered']
    #allocation12 [shape = 'u8[106496]{0}', space=vmem, size = 0x1a000, scoped, tag = 'output window, operand 0']
    %14 = vsyncpa [#allocation3], 0
    %s15 = scalar_lea.sflag [#allocation3], 1
    %16 = vsyncpa %s15, 0
    %17 = vsyncpa [#allocation6], 0
    %18 = vsyncpa [#allocation10], 0
    %s19 = scalar_lea.sflag [#allocation10], 1
    %20 = vsyncpa %s19, 0
    %21 = vsyncpa [#allocation4], 0
    %s22 = scalar_lea.sflag [#allocation4], 1
    %23 = vsyncpa %s22, 0
    loop: start=0, step=1, limit=4
    $region2: #{tpu_custom_call.1} parent=1 // loop_pre_header
      _
    $region3: #{tpu_custom_call.1} parent=1 // loop_header
      %s25 = sphi 0, %s29
      %p26 = scmp.ge.s32.totalorder %s25, 4
      %s35 = sphi 0, %s37
      %s38 = sphi 0, %s35
      %s39 = sphi 0, %s38
      %s55 = sphi 0, %s39
      %s59 = sphi 0, %s59
      %s61 = sphi 0, %s59
      %s62 = sphi 0, %s61
      %s76 = sphi 0, %s62
      %s80 = sphi 0, %s80
      %s82 = sphi 0, %s80
      %s83 = sphi 0, %s82
      %s97 = sphi 0, %s83
      %s103 = sphi 0, %s105
      %s106 = sphi 0, %s103
      %s107 = sphi 0, %s106
      %s123 = sphi 0, %s107
      %s127 = sphi 0, %s127
      %s129 = sphi 0, %s127
      %s130 = sphi 0, %s129
      %s144 = sphi 0, %s130
      %s148 = sphi 0, %s148
      %s150 = sphi 0, %s148
      %s151 = sphi 0, %s150
      %s165 = sphi 0, %s151
      %s171 = sphi 0, %s173
      %s174 = sphi 0, %s171
      %s175 = sphi 0, %s174
      %s191 = sphi 0, %s175
      %s195 = sphi 0, %s195
      %s197 = sphi 0, %s195
      %s198 = sphi 0, %s197
      %s212 = sphi 0, %s198
      %s216 = sphi 0, %s216
      %s218 = sphi 0, %s216
      %s219 = sphi 0, %s218
      %s233 = sphi 0, %s219
      %s239 = sphi 0, %s241
      %s242 = sphi 0, %s239
      %s243 = sphi 0, %s242
      %s259 = sphi 0, %s243
    $region4: #{tpu_custom_call.1} parent=1 // loop_header_branch
      %28 = sbr.rel (%p26) target = $region8
    $region5: #{tpu_custom_call.1} parent=1 // loop_body
      %s30 = ssub.s32 %s25, 1
      %s31 = ssub.s32 %s25, 2
      %s32 = sadd.s32 %s25, 1
      %s33 = ssub.s32 %s25, %s32
      %p34 = scmp.eq.s32.totalorder %s33, 0
      %s36 = sadd.s32 %s35, 1
      %s37 = scalar_select %p34, %s35, %s36
      %p40 = pneg %p34
      %p41 = scmp.eq.s32.totalorder %s25, 1
      %p42 = por %p40, %p41
      %p43 = scmp.ne.s32.totalorder %s35, %s38
      %p44 = scmp.eq.s32.totalorder %s25, 0
      %p45 = por %p43, %p44
      %p46 = scmp.ne.s32.totalorder %s35, %s38
      %p47 = scmp.eq.s32.totalorder %s30, 1
      %p48 = por %p46, %p47
      %p49 = scmp.ne.s32.totalorder %s38, %s39
      %p50 = scmp.eq.s32.totalorder %s30, 0
      %p51 = por %p49, %p50
      %p52 = scmp.ne.s32.totalorder %s38, %s39
      %p53 = scmp.eq.s32.totalorder %s31, 1
      %p54 = por %p52, %p53
      %p56 = scmp.ne.s32.totalorder %s39, %s55
      %p57 = scmp.eq.s32.totalorder %s31, 0
      %p58 = por %p56, %p57
      %s60 = sadd.s32 %s59, 1
      %p63 = scmp.eq.s32.totalorder %s25, 1
      %p64 = scmp.ne.s32.totalorder %s59, %s61
      %p65 = scmp.eq.s32.totalorder %s25, 0
      %p66 = por %p64, %p65
      %p67 = scmp.ne.s32.totalorder %s59, %s61
      %p68 = scmp.eq.s32.totalorder %s30, 1
      %p69 = por %p67, %p68
      %p70 = scmp.ne.s32.totalorder %s61, %s62
      %p71 = scmp.eq.s32.totalorder %s30, 0
      %p72 = por %p70, %p71
      %p73 = scmp.ne.s32.totalorder %s61, %s62
      %p74 = scmp.eq.s32.totalorder %s31, 1
      %p75 = por %p73, %p74
      %p77 = scmp.ne.s32.totalorder %s62, %s76
      %p78 = scmp.eq.s32.totalorder %s31, 0
      %p79 = por %p77, %p78
      %s81 = sadd.s32 %s80, 1
      %p84 = scmp.eq.s32.totalorder %s25, 1
      %p85 = scmp.ne.s32.totalorder %s80, %s82
      %p86 = scmp.eq.s32.totalorder %s25, 0
      %p87 = por %p85, %p86
      %p88 = scmp.ne.s32.totalorder %s80, %s82
      %p89 = scmp.eq.s32.totalorder %s30, 1
      %p90 = por %p88, %p89
      %p91 = scmp.ne.s32.totalorder %s82, %s83
      %p92 = scmp.eq.s32.totalorder %s30, 0
      %p93 = por %p91, %p92
      %p94 = scmp.ne.s32.totalorder %s82, %s83
      %p95 = scmp.eq.s32.totalorder %s31, 1
      %p96 = por %p94, %p95
      %p98 = scmp.ne.s32.totalorder %s83, %s97
      %p99 = scmp.eq.s32.totalorder %s31, 0
      %p100 = por %p98, %p99
      %s101 = ssub.s32 %s25, %s32
      %p102 = scmp.eq.s32.totalorder %s101, 0
      %s104 = sadd.s32 %s103, 1
      %s105 = scalar_select %p102, %s103, %s104
      %p108 = pneg %p102
      %p109 = scmp.eq.s32.totalorder %s25, 1
      %p110 = por %p108, %p109
      %p111 = scmp.ne.s32.totalorder %s103, %s106
      %p112 = scmp.eq.s32.totalorder %s25, 0
      %p113 = por %p111, %p112
      %p114 = scmp.ne.s32.totalorder %s103, %s106
      %p115 = scmp.eq.s32.totalorder %s30, 1
      %p116 = por %p114, %p115
      %p117 = scmp.ne.s32.totalorder %s106, %s107
      %p118 = scmp.eq.s32.totalorder %s30, 0
      %p119 = por %p117, %p118
      %p120 = scmp.ne.s32.totalorder %s106, %s107
      %p121 = scmp.eq.s32.totalorder %s31, 1
      %p122 = por %p120, %p121
      %p124 = scmp.ne.s32.totalorder %s107, %s123
      %p125 = scmp.eq.s32.totalorder %s31, 0
      %p126 = por %p124, %p125
      %s128 = sadd.s32 %s127, 1
      %p131 = scmp.eq.s32.totalorder %s25, 1
      %p132 = scmp.ne.s32.totalorder %s127, %s129
      %p133 = scmp.eq.s32.totalorder %s25, 0
      %p134 = por %p132, %p133
      %p135 = scmp.ne.s32.totalorder %s127, %s129
      %p136 = scmp.eq.s32.totalorder %s30, 1
      %p137 = por %p135, %p136
      %p138 = scmp.ne.s32.totalorder %s129, %s130
      %p139 = scmp.eq.s32.totalorder %s30, 0
      %p140 = por %p138, %p139
      %p141 = scmp.ne.s32.totalorder %s129, %s130
      %p142 = scmp.eq.s32.totalorder %s31, 1
      %p143 = por %p141, %p142
      %p145 = scmp.ne.s32.totalorder %s130, %s144
      %p146 = scmp.eq.s32.totalorder %s31, 0
      %p147 = por %p145, %p146
      %s149 = sadd.s32 %s148, 1
      %p152 = scmp.eq.s32.totalorder %s25, 1
      %p153 = scmp.ne.s32.totalorder %s148, %s150
      %p154 = scmp.eq.s32.totalorder %s25, 0
      %p155 = por %p153, %p154
      %p156 = scmp.ne.s32.totalorder %s148, %s150
      %p157 = scmp.eq.s32.totalorder %s30, 1
      %p158 = por %p156, %p157
      %p159 = scmp.ne.s32.totalorder %s150, %s151
      %p160 = scmp.eq.s32.totalorder %s30, 0
      %p161 = por %p159, %p160
      %p162 = scmp.ne.s32.totalorder %s150, %s151
      %p163 = scmp.eq.s32.totalorder %s31, 1
      %p164 = por %p162, %p163
      %p166 = scmp.ne.s32.totalorder %s151, %s165
      %p167 = scmp.eq.s32.totalorder %s31, 0
      %p168 = por %p166, %p167
      %s169 = ssub.s32 %s25, %s32
      %p170 = scmp.eq.s32.totalorder %s169, 0
      %s172 = sadd.s32 %s171, 1
      %s173 = scalar_select %p170, %s171, %s172
      %p176 = pneg %p170
      %p177 = scmp.eq.s32.totalorder %s25, 1
      %p178 = por %p176, %p177
      %p179 = scmp.ne.s32.totalorder %s171, %s174
      %p180 = scmp.eq.s32.totalorder %s25, 0
      %p181 = por %p179, %p180
      %p182 = scmp.ne.s32.totalorder %s171, %s174
      %p183 = scmp.eq.s32.totalorder %s30, 1
      %p184 = por %p182, %p183
      %p185 = scmp.ne.s32.totalorder %s174, %s175
      %p186 = scmp.eq.s32.totalorder %s30, 0
      %p187 = por %p185, %p186
      %p188 = scmp.ne.s32.totalorder %s174, %s175
      %p189 = scmp.eq.s32.totalorder %s31, 1
      %p190 = por %p188, %p189
      %p192 = scmp.ne.s32.totalorder %s175, %s191
      %p193 = scmp.eq.s32.totalorder %s31, 0
      %p194 = por %p192, %p193
      %s196 = sadd.s32 %s195, 1
      %p199 = scmp.eq.s32.totalorder %s25, 1
      %p200 = scmp.ne.s32.totalorder %s195, %s197
      %p201 = scmp.eq.s32.totalorder %s25, 0
      %p202 = por %p200, %p201
      %p203 = scmp.ne.s32.totalorder %s195, %s197
      %p204 = scmp.eq.s32.totalorder %s30, 1
      %p205 = por %p203, %p204
      %p206 = scmp.ne.s32.totalorder %s197, %s198
      %p207 = scmp.eq.s32.totalorder %s30, 0
      %p208 = por %p206, %p207
      %p209 = scmp.ne.s32.totalorder %s197, %s198
      %p210 = scmp.eq.s32.totalorder %s31, 1
      %p211 = por %p209, %p210
      %p213 = scmp.ne.s32.totalorder %s198, %s212
      %p214 = scmp.eq.s32.totalorder %s31, 0
      %p215 = por %p213, %p214
      %s217 = sadd.s32 %s216, 1
      %p220 = scmp.eq.s32.totalorder %s25, 1
      %p221 = scmp.ne.s32.totalorder %s216, %s218
      %p222 = scmp.eq.s32.totalorder %s25, 0
      %p223 = por %p221, %p222
      %p224 = scmp.ne.s32.totalorder %s216, %s218
      %p225 = scmp.eq.s32.totalorder %s30, 1
      %p226 = por %p224, %p225
      %p227 = scmp.ne.s32.totalorder %s218, %s219
      %p228 = scmp.eq.s32.totalorder %s30, 0
      %p229 = por %p227, %p228
      %p230 = scmp.ne.s32.totalorder %s218, %s219
      %p231 = scmp.eq.s32.totalorder %s31, 1
      %p232 = por %p230, %p231
      %p234 = scmp.ne.s32.totalorder %s219, %s233
      %p235 = scmp.eq.s32.totalorder %s31, 0
      %p236 = por %p234, %p235
      %s237 = ssub.s32 %s25, %s32
      %p238 = scmp.eq.s32.totalorder %s237, 0
      %s240 = sadd.s32 %s239, 1
      %s241 = scalar_select %p238, %s239, %s240
      %p244 = pneg %p238
      %p245 = scmp.eq.s32.totalorder %s25, 1
      %p246 = por %p244, %p245
      %p247 = scmp.ne.s32.totalorder %s239, %s242
      %p248 = scmp.eq.s32.totalorder %s25, 0
      %p249 = por %p247, %p248
      %p250 = scmp.ne.s32.totalorder %s239, %s242
      %p251 = scmp.eq.s32.totalorder %s30, 1
      %p252 = por %p250, %p251
      %p253 = scmp.ne.s32.totalorder %s242, %s243
      %p254 = scmp.eq.s32.totalorder %s30, 0
      %p255 = por %p253, %p254
      %p256 = scmp.ne.s32.totalorder %s242, %s243
      %p257 = scmp.eq.s32.totalorder %s31, 1
      %p258 = por %p256, %p257
      %p260 = scmp.ne.s32.totalorder %s243, %s259
      %p261 = scmp.eq.s32.totalorder %s31, 0
      %p262 = por %p260, %p261
      %p263 = scmp.le.s32.totalorder 1, %s25
      %p264 = scmp.lt.s32.totalorder %s25, 3
      %p265 = pnand %p263, %p264
      %p266 = pneg %p265
      // Predicated region
      $region9: #{tpu_custom_call.1} parent=5 // pred_check
        _
      $region10: #{tpu_custom_call.1} parent=5 // pred_check_branch
        %268 = sbr.rel (%p265) target = $region12
      $region11: #{tpu_custom_call.1} parent=5 // pred_region
        %s269 = ssub.s32 %s25, 1
        // Predicated region
        $region13: #{tpu_custom_call.1} parent=11 // pred_check
          %p270 = pneg %p72
        $region14: #{tpu_custom_call.1} parent=11 // pred_check_branch
          %272 = sbr.rel (%p270) target = $region16
        $region15: #{tpu_custom_call.1} parent=11 // pred_region
          %s274 = ssub.s32 2048, 2048
          %275 = vsyncadd [#allocation6], %s274
          %s276 = sshll.u32 [#allocation5], 4
          %s277 = int_to_ptr.vmem [resolvable:$true] %s276
          %282 = dma.hbm_to_vmem [thread:$0]  %s1, 2048, %s277, [#allocation6], 64, 64, 4
        $region16: #{tpu_custom_call.1} parent=11 // pred_fallthru
          _
        // Predicated region
        $region17: #{tpu_custom_call.1} parent=11 // pred_check
          %p283 = pneg %p93
        $region18: #{tpu_custom_call.1} parent=11 // pred_check_branch
          %285 = sbr.rel (%p283) target = $region20
        $region19: #{tpu_custom_call.1} parent=11 // pred_region
          _
        $region20: #{tpu_custom_call.1} parent=11 // pred_fallthru
          _
        // Predicated region
        $region21: #{tpu_custom_call.1} parent=11 // pred_check
          %p286 = pneg %p140
        $region22: #{tpu_custom_call.1} parent=11 // pred_check_branch
          %288 = sbr.rel (%p286) target = $region24
        $region23: #{tpu_custom_call.1} parent=11 // pred_region
          %s290 = ssub.s32 1024, 1024
          %291 = vsyncadd [#allocation6], %s290
          %s292 = sshll.u32 [#allocation8], 4
          %s293 = int_to_ptr.vmem [resolvable:$true] %s292
          %298 = dma.hbm_to_vmem [thread:$0]  %s4, 1024, %s293, [#allocation6], 64, 64, 4
        $region24: #{tpu_custom_call.1} parent=11 // pred_fallthru
          _
        // Predicated region
        $region25: #{tpu_custom_call.1} parent=11 // pred_check
          %p299 = pneg %p161
        $region26: #{tpu_custom_call.1} parent=11 // pred_check_branch
          %301 = sbr.rel (%p299) target = $region28
        $region27: #{tpu_custom_call.1} parent=11 // pred_region
          _
        $region28: #{tpu_custom_call.1} parent=11 // pred_fallthru
          _
        // Predicated region
        $region29: #{tpu_custom_call.1} parent=11 // pred_check
          %p302 = pneg %p208
        $region30: #{tpu_custom_call.1} parent=11 // pred_check_branch
          %304 = sbr.rel (%p302) target = $region32
        $region31: #{tpu_custom_call.1} parent=11 // pred_region
          %s306 = ssub.s32 1024, 1024
          %307 = vsyncadd [#allocation10], %s306
          %s308 = sshll.u32 [#allocation11], 4
          %s309 = int_to_ptr.vmem [resolvable:$true] %s308
          %314 = dma.hbm_to_vmem [thread:$0]  %s7, 1024, %s309, [#allocation10], 64, 64, 4
        $region32: #{tpu_custom_call.1} parent=11 // pred_fallthru
          _
        // Predicated region
        $region33: #{tpu_custom_call.1} parent=11 // pred_check
          %p315 = pneg %p229
        $region34: #{tpu_custom_call.1} parent=11 // pred_check_branch
          %317 = sbr.rel (%p315) target = $region36
        $region35: #{tpu_custom_call.1} parent=11 // pred_region
          _
        $region36: #{tpu_custom_call.1} parent=11 // pred_fallthru
          _
      $region12: #{tpu_custom_call.1} parent=5 // pred_fallthru
        _
      %p318 = scmp.lt.s32.totalorder %s25, 2
      // Predicated region
      $region37: #{tpu_custom_call.1} parent=5 // pred_check
        %p319 = pneg %p318
      $region38: #{tpu_custom_call.1} parent=5 // pred_check_branch
        %321 = sbr.rel (%p319) target = $region40
      $region39: #{tpu_custom_call.1} parent=5 // pred_region
        // Predicated region
        $region41: #{tpu_custom_call.1} parent=39 // pred_check
          %p322 = pneg %p45
        $region42: #{tpu_custom_call.1} parent=39 // pred_check_branch
          %324 = sbr.rel (%p322) target = $region44
        $region43: #{tpu_custom_call.1} parent=39 // pred_region
          %s325 = sand.u32 %s25, 1
          %s326 = scalar_lea.sflag [#allocation3], %s325
          %s327 = sand.u32 %s35, 1
          %s328 = smul.addr %s327, 104
          %s329 = scalar_lea.vmem [#allocation2], %s328
          %s330 = smul.u32 13, %s25
          %s332 = ssub.s32 1664, 1664
          %333 = vsyncadd %s326, %s332
          %s334 = smul.addr %s330, 2
          %s335 = smul.addr %s334, 64
          %s336 = scalar_lea.hbm %s0, %s335
          %s337 = sshll.u32 %s329, 4
          %s338 = int_to_ptr.vmem [resolvable:$true] %s337
          %343 = dma.hbm_to_vmem [thread:$0]  %s336, 1664, %s338, %s326, 128, 128, 8
        $region44: #{tpu_custom_call.1} parent=39 // pred_fallthru
          _
        // Predicated region
        $region45: #{tpu_custom_call.1} parent=39 // pred_check
          %p344 = pneg %p113
        $region46: #{tpu_custom_call.1} parent=39 // pred_check_branch
          %346 = sbr.rel (%p344) target = $region48
        $region47: #{tpu_custom_call.1} parent=39 // pred_region
          %s347 = sand.u32 %s25, 1
          %s348 = scalar_lea.sflag [#allocation3], %s347
          %s349 = sand.u32 %s103, 1
          %s350 = smul.addr %s349, 52
          %s351 = scalar_lea.vmem [#allocation7], %s350
          %s352 = smul.u32 13, %s25
          %s354 = ssub.s32 832, 832
          %355 = vsyncadd %s348, %s354
          %s356 = smul.addr %s352, 64
          %s357 = scalar_lea.hbm %s3, %s356
          %s358 = sshll.u32 %s351, 4
          %s359 = int_to_ptr.vmem [resolvable:$true] %s358
          %364 = dma.hbm_to_vmem [thread:$0]  %s357, 832, %s359, %s348, 64, 64, 4
        $region48: #{tpu_custom_call.1} parent=39 // pred_fallthru
          _
        // Predicated region
        $region49: #{tpu_custom_call.1} parent=39 // pred_check
          %p365 = pneg %p181
        $region50: #{tpu_custom_call.1} parent=39 // pred_check_branch
          %367 = sbr.rel (%p365) target = $region52
        $region51: #{tpu_custom_call.1} parent=39 // pred_region
          %s368 = sand.u32 %s25, 1
          %s369 = scalar_lea.sflag [#allocation10], %s368
          %s370 = sand.u32 %s171, 1
          %s371 = smul.addr %s370, 52
          %s372 = scalar_lea.vmem [#allocation9], %s371
          %s373 = smul.u32 13, %s25
          %s375 = ssub.s32 832, 832
          %376 = vsyncadd %s369, %s375
          %s377 = smul.addr %s373, 64
          %s378 = scalar_lea.hbm %s6, %s377
          %s379 = sshll.u32 %s372, 4
          %s380 = int_to_ptr.vmem [resolvable:$true] %s379
          %385 = dma.hbm_to_vmem [thread:$0]  %s378, 832, %s380, %s369, 64, 64, 4
        $region52: #{tpu_custom_call.1} parent=39 // pred_fallthru
          _
      $region40: #{tpu_custom_call.1} parent=5 // pred_fallthru
        _
      %p386 = scmp.le.s32.totalorder 1, %s25
      %p387 = scmp.lt.s32.totalorder %s25, 3
      %p388 = pnand %p386, %p387
      %p389 = pneg %p388
      // Predicated region
      $region53: #{tpu_custom_call.1} parent=5 // pred_check
        _
      $region54: #{tpu_custom_call.1} parent=5 // pred_check_branch
        %391 = sbr.rel (%p388) target = $region56
      $region55: #{tpu_custom_call.1} parent=5 // pred_region
        %s392 = ssub.s32 %s25, 1
        %s393 = sand.u32 %s30, 1
        %s394 = scalar_lea.sflag [#allocation3], %s393
        %s395 = sand.u32 %s38, 1
        %s396 = smul.addr %s395, 104
        %s397 = scalar_lea.vmem [#allocation2], %s396
        // Predicated region
        $region57: #{tpu_custom_call.1} parent=55 // pred_check
          %p398 = pneg %p51
        $region58: #{tpu_custom_call.1} parent=55 // pred_check_branch
          %400 = sbr.rel (%p398) target = $region60
        $region59: #{tpu_custom_call.1} parent=55 // pred_region
          %401 = dma.done %s394, 1664
        $region60: #{tpu_custom_call.1} parent=55 // pred_fallthru
          _
        // Predicated region
        $region61: #{tpu_custom_call.1} parent=55 // pred_check
          %p402 = pneg %p72
        $region62: #{tpu_custom_call.1} parent=55 // pred_check_branch
          %404 = sbr.rel (%p402) target = $region64
        $region63: #{tpu_custom_call.1} parent=55 // pred_region
          %405 = dma.done [#allocation6], 2048
        $region64: #{tpu_custom_call.1} parent=55 // pred_fallthru
          _
        %s406 = sand.u32 %s30, 1
        %s407 = scalar_lea.sflag [#allocation3], %s406
        %s408 = sand.u32 %s106, 1
        %s409 = smul.addr %s408, 52
        %s410 = scalar_lea.vmem [#allocation7], %s409
        // Predicated region
        $region65: #{tpu_custom_call.1} parent=55 // pred_check
          %p411 = pneg %p119
        $region66: #{tpu_custom_call.1} parent=55 // pred_check_branch
          %413 = sbr.rel (%p411) target = $region68
        $region67: #{tpu_custom_call.1} parent=55 // pred_region
          %414 = dma.done %s407, 832
        $region68: #{tpu_custom_call.1} parent=55 // pred_fallthru
          _
        // Predicated region
        $region69: #{tpu_custom_call.1} parent=55 // pred_check
          %p415 = pneg %p140
        $region70: #{tpu_custom_call.1} parent=55 // pred_check_branch
          %417 = sbr.rel (%p415) target = $region72
        $region71: #{tpu_custom_call.1} parent=55 // pred_region
          %418 = dma.done [#allocation6], 1024
        $region72: #{tpu_custom_call.1} parent=55 // pred_fallthru
          _
        %s419 = sand.u32 %s30, 1
        %s420 = scalar_lea.sflag [#allocation10], %s419
        %s421 = sand.u32 %s174, 1
        %s422 = smul.addr %s421, 52
        %s423 = scalar_lea.vmem [#allocation9], %s422
        // Predicated region
        $region73: #{tpu_custom_call.1} parent=55 // pred_check
          %p424 = pneg %p187
        $region74: #{tpu_custom_call.1} parent=55 // pred_check_branch
          %426 = sbr.rel (%p424) target = $region76
        $region75: #{tpu_custom_call.1} parent=55 // pred_region
          %427 = dma.done %s420, 832
        $region76: #{tpu_custom_call.1} parent=55 // pred_fallthru
          _
        // Predicated region
        $region77: #{tpu_custom_call.1} parent=55 // pred_check
          %p428 = pneg %p208
        $region78: #{tpu_custom_call.1} parent=55 // pred_check_branch
          %430 = sbr.rel (%p428) target = $region80
        $region79: #{tpu_custom_call.1} parent=55 // pred_region
          %431 = dma.done [#allocation10], 1024
        $region80: #{tpu_custom_call.1} parent=55 // pred_fallthru
          _
        %s432 = sand.u32 %s30, 1
        %s433 = scalar_lea.sflag [#allocation3], %s432
        %s434 = sand.u32 %s38, 1
        %s435 = smul.addr %s434, 104
        %s436 = scalar_lea.vmem [#allocation2], %s435
        %p437 = pneg %p51
        %p438 = pneg %p48
        %p439 = pneg %p72
        %p440 = pneg %p69
        %p441 = pneg %p93
        %p442 = pneg %p90
        %s443 = sand.u32 %s30, 1
        %s444 = scalar_lea.sflag [#allocation3], %s443
        %s445 = sand.u32 %s106, 1
        %s446 = smul.addr %s445, 52
        %s447 = scalar_lea.vmem [#allocation7], %s446
        %p448 = pneg %p119
        %p449 = pneg %p116
        %p450 = pneg %p140
        %p451 = pneg %p137
        %p452 = pneg %p161
        %p453 = pneg %p158
        %s454 = sand.u32 %s30, 1
        %s455 = scalar_lea.sflag [#allocation10], %s454
        %s456 = sand.u32 %s174, 1
        %s457 = smul.addr %s456, 52
        %s458 = scalar_lea.vmem [#allocation9], %s457
        %p459 = pneg %p187
        %p460 = pneg %p184
        %p461 = pneg %p208
        %p462 = pneg %p205
        %p463 = pneg %p229
        %p464 = pneg %p226
        %p465 = pneg %p255
        %p466 = pneg %p252
        %s467 = sand.u32 %s242, 1
        %s468 = scalar_lea.sflag [#allocation4], %s467
        %s469 = sand.u32 %s242, 1
        %s470 = smul.addr %s469, 104
        %s471 = scalar_lea.vmem [#allocation12], %s470
        %s472 = smul.u32 13, %s30
        %s473 = smul.u32 13, %s30
        %s474 = smul.u32 13, %s30
        %s475 = smul.u32 13, %s30
        %v481 = vld [vmem:[%s397] sm:$0xff]
        %v482 = vld [vmem:[%s397 + $0x8] sm:$0xff]
        %v483 = vld [vmem:[%s397 + $0x10] sm:$0xff]
        %v484 = vld [vmem:[%s397 + $0x18] sm:$0xff]
        %v485 = vld [vmem:[%s397 + $0x20] sm:$0xff]
        %v486 = vld [vmem:[%s397 + $0x28] sm:$0xff]
        %v487 = vld [vmem:[%s397 + $0x30] sm:$0xff]
        %v488 = vld [vmem:[%s397 + $0x38] sm:$0xff]
        %v489 = vld [vmem:[%s397 + $0x40] sm:$0xff]
        %v490 = vld [vmem:[%s397 + $0x48] sm:$0xff]
        %v491 = vld [vmem:[%s397 + $0x50] sm:$0xff]
        %v492 = vld [vmem:[%s397 + $0x58] sm:$0xff]
        %v493 = vld [vmem:[%s397 + $0x60] sm:$0xff]
        %v494 = vld [vmem:[#allocation5] sm:$0xf]
        %v495 = vld [vmem:[#allocation5 + $0x4] sm:$0xf]
        %v496 = vld [vmem:[#allocation5 + $0x8] sm:$0xf]
        %v497 = vld [vmem:[#allocation5 + $0xc] sm:$0xf]
        %v498 = vld [vmem:[#allocation5 + $0x10] sm:$0xf]
        %v499 = vld [vmem:[#allocation5 + $0x14] sm:$0xf]
        %v500 = vld [vmem:[#allocation5 + $0x18] sm:$0xf]
        %v501 = vld [vmem:[#allocation5 + $0x1c] sm:$0xf]
        %v502 = vld [vmem:[#allocation5 + $0x20] sm:$0xf]
        %v503 = vld [vmem:[#allocation5 + $0x24] sm:$0xf]
        %v504 = vld [vmem:[#allocation5 + $0x28] sm:$0xf]
        %v505 = vld [vmem:[#allocation5 + $0x2c] sm:$0xf]
        %v506 = vld [vmem:[#allocation5 + $0x30] sm:$0xf]
        %v507 = vld [vmem:[#allocation5 + $0x34] sm:$0xf]
        %v508 = vld [vmem:[#allocation5 + $0x38] sm:$0xf]
        %v509 = vld [vmem:[#allocation5 + $0x3c] sm:$0xf]
        %v510 = vld [vmem:[#allocation5 + $0x40] sm:$0xf]
        %v511 = vld [vmem:[#allocation5 + $0x44] sm:$0xf]
        %v512 = vld [vmem:[#allocation5 + $0x48] sm:$0xf]
        %v513 = vld [vmem:[#allocation5 + $0x4c] sm:$0xf]
        %v514 = vld [vmem:[#allocation5 + $0x50] sm:$0xf]
        %v515 = vld [vmem:[#allocation5 + $0x54] sm:$0xf]
        %v516 = vld [vmem:[#allocation5 + $0x58] sm:$0xf]
        %v517 = vld [vmem:[#allocation5 + $0x5c] sm:$0xf]
        %v518 = vld [vmem:[#allocation5 + $0x60] sm:$0xf]
        %v519 = vld [vmem:[#allocation5 + $0x64] sm:$0xf]
        %v520 = vld [vmem:[#allocation5 + $0x68] sm:$0xf]
        %v521 = vld [vmem:[#allocation5 + $0x6c] sm:$0xf]
        %v522 = vld [vmem:[#allocation5 + $0x70] sm:$0xf]
        %v523 = vld [vmem:[#allocation5 + $0x74] sm:$0xf]
        %v524 = vld [vmem:[#allocation5 + $0x78] sm:$0xf]
        %v525 = vld [vmem:[#allocation5 + $0x7c] sm:$0xf]
        %v526 = vld [vmem:[%s2] sm:$0x1]
        %v528 = vlaneseq
        %v529 = vshrl.u32 %v528, 7
        %v530 = vsub.s32 0, %v529
        %v531 = vrot.slane %v526, %v530
        %v546 = vunpack.c.l.b16 %v481
        %v547 = vunpack.c.h.b16 %v481
        %v548 = vunpack.c.l.b16 %v482
        %v549 = vunpack.c.h.b16 %v482
        %v550 = vunpack.c.l.b16 %v483
        %v551 = vunpack.c.h.b16 %v483
        %v552 = vunpack.c.l.b16 %v484
        %v553 = vunpack.c.h.b16 %v484
        %v554 = vunpack.c.l.b16 %v485
        %v555 = vunpack.c.h.b16 %v485
        %v556 = vunpack.c.l.b16 %v486
        %v557 = vunpack.c.h.b16 %v486
        %v558 = vunpack.c.l.b16 %v487
        %v559 = vunpack.c.h.b16 %v487
        %v560 = vunpack.c.l.b16 %v488
        %v561 = vunpack.c.h.b16 %v488
        %v562 = vunpack.c.l.b16 %v489
        %v563 = vunpack.c.h.b16 %v489
        %v564 = vunpack.c.l.b16 %v490
        %v565 = vunpack.c.h.b16 %v490
        %v566 = vunpack.c.l.b16 %v491
        %v567 = vunpack.c.h.b16 %v491
        %v568 = vunpack.c.l.b16 %v492
        %v569 = vunpack.c.h.b16 %v492
        %v570 = vunpack.c.l.b16 %v493
        %v571 = vunpack.c.h.b16 %v493
        %v572 = vpack.c.b16 %v548, %v546
        %v573 = vpack.c.b16 %v549, %v547
        %v574 = vpack.c.b16 %v552, %v550
        %v575 = vpack.c.b16 %v553, %v551
        %v576 = vpack.c.b16 %v556, %v554
        %v577 = vpack.c.b16 %v557, %v555
        %v578 = vpack.c.b16 %v560, %v558
        %v579 = vpack.c.b16 %v561, %v559
        %v580 = vpack.c.b16 %v564, %v562
        %v581 = vpack.c.b16 %v565, %v563
        %v582 = vpack.c.b16 %v568, %v566
        %v583 = vpack.c.b16 %v569, %v567
        %v584 = vpack.c.b16 %v570, %v570
        %v585 = vpack.c.b16 %v571, %v571
        %v632 = vunpack.c.l.b16 %v494
        %v633 = vunpack.c.l.b16 %v495
        %v634 = vunpack.c.l.b16 %v496
        %v635 = vunpack.c.l.b16 %v497
        %v636 = vunpack.c.l.b16 %v498
        %v637 = vunpack.c.l.b16 %v499
        %v638 = vunpack.c.l.b16 %v500
        %v639 = vunpack.c.l.b16 %v501
        %v640 = vunpack.c.l.b16 %v502
        %v641 = vunpack.c.l.b16 %v503
        %v642 = vunpack.c.l.b16 %v504
        %v643 = vunpack.c.l.b16 %v505
        %v644 = vunpack.c.l.b16 %v506
        %v645 = vunpack.c.l.b16 %v507
        %v646 = vunpack.c.l.b16 %v508
        %v647 = vunpack.c.l.b16 %v509
        %v648 = vunpack.c.l.b16 %v510
        %v649 = vunpack.c.l.b16 %v511
        %v650 = vunpack.c.l.b16 %v512
        %v651 = vunpack.c.l.b16 %v513
        %v652 = vunpack.c.l.b16 %v514
        %v653 = vunpack.c.l.b16 %v515
        %v654 = vunpack.c.l.b16 %v516
        %v655 = vunpack.c.l.b16 %v517
        %v656 = vunpack.c.l.b16 %v518
        %v657 = vunpack.c.l.b16 %v519
        %v658 = vunpack.c.l.b16 %v520
        %v659 = vunpack.c.l.b16 %v521
        %v660 = vunpack.c.l.b16 %v522
        %v661 = vunpack.c.l.b16 %v523
        %v662 = vunpack.c.l.b16 %v524
        %v663 = vunpack.c.l.b16 %v525
        %v664 = vpack.c.b16 %v633, %v632
        %v665 = vpack.c.b16 %v635, %v634
        %v666 = vpack.c.b16 %v637, %v636
        %v667 = vpack.c.b16 %v639, %v638
        %v668 = vpack.c.b16 %v641, %v640
        %v669 = vpack.c.b16 %v643, %v642
        %v670 = vpack.c.b16 %v645, %v644
        %v671 = vpack.c.b16 %v647, %v646
        %v672 = vpack.c.b16 %v649, %v648
        %v673 = vpack.c.b16 %v651, %v650
        %v674 = vpack.c.b16 %v653, %v652
        %v675 = vpack.c.b16 %v655, %v654
        %v676 = vpack.c.b16 %v657, %v656
        %v677 = vpack.c.b16 %v659, %v658
        %v678 = vpack.c.b16 %v661, %v660
        %v679 = vpack.c.b16 %v663, %v662
        %696 = vmatprep.subr.bf16.mxu0 0
        %697 = vmatpush1.bf16.msra.mxu0 %v664
        %698 = vmatprep.subr.bf16.mxu0 0
        %699 = vmatpush1.bf16.msra.mxu0 %v665
        %700 = vmatprep.subr.bf16.mxu0 0
        %701 = vmatpush1.bf16.msra.mxu0 %v666
        %702 = vmatprep.subr.bf16.mxu0 0
        %703 = vmatpush1.bf16.msra.mxu0 %v667
        %704 = vmatprep.subr.bf16.mxu0 0
        %705 = vmatpush1.bf16.msra.mxu0 %v668
        %706 = vmatprep.subr.bf16.mxu0 0
        %707 = vmatpush1.bf16.msra.mxu0 %v669
        %708 = vmatprep.subr.bf16.mxu0 0
        %709 = vmatpush1.bf16.msra.mxu0 %v670
        %710 = vmatprep.subr.bf16.mxu0 0
        %711 = vmatpush1.bf16.msra.mxu0 %v671
        %712 = vmatprep.subr.bf16.mxu0 0
        %713 = vmatpush1.bf16.msra.mxu0 %v672
        %714 = vmatprep.subr.bf16.mxu0 0
        %715 = vmatpush1.bf16.msra.mxu0 %v673
        %716 = vmatprep.subr.bf16.mxu0 0
        %717 = vmatpush1.bf16.msra.mxu0 %v674
        %718 = vmatprep.subr.bf16.mxu0 0
        %719 = vmatpush1.bf16.msra.mxu0 %v675
        %720 = vmatprep.subr.bf16.mxu0 0
        %721 = vmatpush1.bf16.msra.mxu0 %v676
        %722 = vmatprep.subr.bf16.mxu0 0
        %723 = vmatpush1.bf16.msra.mxu0 %v677
        %724 = vmatprep.subr.bf16.mxu0 0
        %725 = vmatpush1.bf16.msra.mxu0 %v678
        %726 = vmatprep.subr.bf16.mxu0 0
        %727 = vmatpush1.bf16.msra.mxu0 %v679
        %728 = vmatprep.mubr.bf16.mxu0 %v573
        %729 = vmatmul.mubr.bf16.gmra.mrb[0].mxu0 %v572
        %v730 = vpop.f32.mrb[0].mxu0
        %v731 = vadd.f32 %v531, %v730
        %v732 = vpop.f32.mrb[0].mxu0
        %v733 = vpop.f32.mrb[0].mxu0
        %v734 = vadd.f32 %v531, %v733
        %v735 = vpop.f32.mrb[0].mxu0
        %736 = vmatprep.mubr.bf16.mxu0 %v575
        %737 = vmatmul.mubr.bf16.gmra.mrb[0].mxu0 %v574
        %v738 = vpop.f32.mrb[0].mxu0
        %v739 = vadd.f32 %v531, %v738
        %v740 = vpop.f32.mrb[0].mxu0
        %v741 = vpop.f32.mrb[0].mxu0
        %v742 = vadd.f32 %v531, %v741
        %v743 = vpop.f32.mrb[0].mxu0
        %744 = vmatprep.mubr.bf16.mxu0 %v577
        %745 = vmatmul.mubr.bf16.gmra.mrb[0].mxu0 %v576
        %v746 = vpop.f32.mrb[0].mxu0
        %v747 = vadd.f32 %v531, %v746
        %v748 = vpop.f32.mrb[0].mxu0
        %v749 = vpop.f32.mrb[0].mxu0
        %v750 = vadd.f32 %v531, %v749
        %v751 = vpop.f32.mrb[0].mxu0
        %752 = vmatprep.mubr.bf16.mxu0 %v579
        %753 = vmatmul.mubr.bf16.gmra.mrb[0].mxu0 %v578
        %v754 = vpop.f32.mrb[0].mxu0
        %v755 = vadd.f32 %v531, %v754
        %v756 = vpop.f32.mrb[0].mxu0
        %v757 = vpop.f32.mrb[0].mxu0
        %v758 = vadd.f32 %v531, %v757
        %v759 = vpop.f32.mrb[0].mxu0
        %760 = vmatprep.mubr.bf16.mxu0 %v581
        %761 = vmatmul.mubr.bf16.gmra.mrb[0].mxu0 %v580
        %v762 = vpop.f32.mrb[0].mxu0
        %v763 = vadd.f32 %v531, %v762
        %v764 = vpop.f32.mrb[0].mxu0
        %v765 = vpop.f32.mrb[0].mxu0
        %v766 = vadd.f32 %v531, %v765
        %v767 = vpop.f32.mrb[0].mxu0
        %768 = vmatprep.mubr.bf16.mxu0 %v583
        %769 = vmatmul.mubr.bf16.gmra.mrb[0].mxu0 %v582
        %v770 = vpop.f32.mrb[0].mxu0
        %v771 = vadd.f32 %v531, %v770
        %v772 = vpop.f32.mrb[0].mxu0
        %v773 = vpop.f32.mrb[0].mxu0
        %v774 = vadd.f32 %v531, %v773
        %v775 = vpop.f32.mrb[0].mxu0
        %776 = vmatprep.mubr.bf16.mxu0 %v585
        %777 = vmatmul.mubr.bf16.gmra.mrb[0].mxu0 %v584
        %v778 = vpop.f32.mrb[0].mxu0
        %v779 = vadd.f32 %v531, %v778
        %v780 = vpop.f32.mrb[0].mxu0
        %v781 = vpop.f32.mrb[0].mxu0
        %v782 = vpop.f32.mrb[0].mxu0
        %783 = vdwg.mxu0
        %v784 = vmax.f32 %v731, 0.0
        %v785 = vmax.f32 %v734, 0.0
        %v786 = vmax.f32 %v739, 0.0
        %v787 = vmax.f32 %v742, 0.0
        %v788 = vmax.f32 %v747, 0.0
        %v789 = vmax.f32 %v750, 0.0
        %v790 = vmax.f32 %v755, 0.0
        %v791 = vmax.f32 %v758, 0.0
        %v792 = vmax.f32 %v763, 0.0
        %v793 = vmax.f32 %v766, 0.0
        %v794 = vmax.f32 %v771, 0.0
        %v795 = vmax.f32 %v774, 0.0
        %v796 = vmax.f32 %v779, 0.0
        %v797 = vld [vmem:[%s410] sm:$0xf]
        %v798 = vld [vmem:[%s410 + $0x4] sm:$0xf]
        %v799 = vld [vmem:[%s410 + $0x8] sm:$0xf]
        %v800 = vld [vmem:[%s410 + $0xc] sm:$0xf]
        %v801 = vld [vmem:[%s410 + $0x10] sm:$0xf]
        %v802 = vld [vmem:[%s410 + $0x14] sm:$0xf]
        %v803 = vld [vmem:[%s410 + $0x18] sm:$0xf]
        %v804 = vld [vmem:[%s410 + $0x1c] sm:$0xf]
        %v805 = vld [vmem:[%s410 + $0x20] sm:$0xf]
        %v806 = vld [vmem:[%s410 + $0x24] sm:$0xf]
        %v807 = vld [vmem:[%s410 + $0x28] sm:$0xf]
        %v808 = vld [vmem:[%s410 + $0x2c] sm:$0xf]
        %v809 = vld [vmem:[%s410 + $0x30] sm:$0xf]
        %vm810 = vcmp.gt.bf16.partialorder %v797, 1045249613
        %vm811 = vcmp.gt.bf16.partialorder %v798, 1045249613
        %vm812 = vcmp.gt.bf16.partialorder %v799, 1045249613
        %vm813 = vcmp.gt.bf16.partialorder %v800, 1045249613
        %vm814 = vcmp.gt.bf16.partialorder %v801, 1045249613
        %vm815 = vcmp.gt.bf16.partialorder %v802, 1045249613
        %vm816 = vcmp.gt.bf16.partialorder %v803, 1045249613
        %vm817 = vcmp.gt.bf16.partialorder %v804, 1045249613
        %vm818 = vcmp.gt.bf16.partialorder %v805, 1045249613
        %vm819 = vcmp.gt.bf16.partialorder %v806, 1045249613
        %vm820 = vcmp.gt.bf16.partialorder %v807, 1045249613
        %vm821 = vcmp.gt.bf16.partialorder %v808, 1045249613
        %vm822 = vcmp.gt.bf16.partialorder %v809, 1045249613
        %v823 = vsel %vm810, 65537, 0
        %v824 = vsel %vm811, 65537, 0
        %v825 = vsel %vm812, 65537, 0
        %v826 = vsel %vm813, 65537, 0
        %v827 = vsel %vm814, 65537, 0
        %v828 = vsel %vm815, 65537, 0
        %v829 = vsel %vm816, 65537, 0
        %v830 = vsel %vm817, 65537, 0
        %v831 = vsel %vm818, 65537, 0
        %v832 = vsel %vm819, 65537, 0
        %v833 = vsel %vm820, 65537, 0
        %v834 = vsel %vm821, 65537, 0
        %v835 = vsel %vm822, 65537, 0
        %v836 = vunpack.c.l.b16 %v823
        %v837 = vunpack.c.l.b16 %v824
        %v838 = vunpack.c.l.b16 %v825
        %v839 = vunpack.c.l.b16 %v826
        %v840 = vunpack.c.l.b16 %v827
        %v841 = vunpack.c.l.b16 %v828
        %v842 = vunpack.c.l.b16 %v829
        %v843 = vunpack.c.l.b16 %v830
        %v844 = vunpack.c.l.b16 %v831
        %v845 = vunpack.c.l.b16 %v832
        %v846 = vunpack.c.l.b16 %v833
        %v847 = vunpack.c.l.b16 %v834
        %v848 = vunpack.c.l.b16 %v835
        %vm849 = vcmp.ne.s32.totalorder %v836, 0
        %vm850 = vcmp.ne.s32.totalorder %v837, 0
        %vm851 = vcmp.ne.s32.totalorder %v838, 0
        %vm852 = vcmp.ne.s32.totalorder %v839, 0
        %vm853 = vcmp.ne.s32.totalorder %v840, 0
        %vm854 = vcmp.ne.s32.totalorder %v841, 0
        %vm855 = vcmp.ne.s32.totalorder %v842, 0
        %vm856 = vcmp.ne.s32.totalorder %v843, 0
        %vm857 = vcmp.ne.s32.totalorder %v844, 0
        %vm858 = vcmp.ne.s32.totalorder %v845, 0
        %vm859 = vcmp.ne.s32.totalorder %v846, 0
        %vm860 = vcmp.ne.s32.totalorder %v847, 0
        %vm861 = vcmp.ne.s32.totalorder %v848, 0
        %v862 = vsel %vm849, %v784, 0.0
        %v863 = vsel %vm850, %v785, 0.0
        %v864 = vsel %vm851, %v786, 0.0
        %v865 = vsel %vm852, %v787, 0.0
        %v866 = vsel %vm853, %v788, 0.0
        %v867 = vsel %vm854, %v789, 0.0
        %v868 = vsel %vm855, %v790, 0.0
        %v869 = vsel %vm856, %v791, 0.0
        %v870 = vsel %vm857, %v792, 0.0
        %v871 = vsel %vm858, %v793, 0.0
        %v872 = vsel %vm859, %v794, 0.0
        %v873 = vsel %vm860, %v795, 0.0
        %v874 = vsel %vm861, %v796, 0.0
        %v875 = vpack.c.bf16 %v863, %v862
        %v876 = vpack.c.bf16 %v865, %v864
        %v877 = vpack.c.bf16 %v867, %v866
        %v878 = vpack.c.bf16 %v869, %v868
        %v879 = vpack.c.bf16 %v871, %v870
        %v880 = vpack.c.bf16 %v873, %v872
        %v881 = vpack.c.bf16 %v874, %v874
        %v882 = vld [vmem:[#allocation8] sm:$0xf]
        %v883 = vld [vmem:[#allocation8 + $0x4] sm:$0xf]
        %v884 = vld [vmem:[#allocation8 + $0x8] sm:$0xf]
        %v885 = vld [vmem:[#allocation8 + $0xc] sm:$0xf]
        %v886 = vld [vmem:[#allocation8 + $0x10] sm:$0xf]
        %v887 = vld [vmem:[#allocation8 + $0x14] sm:$0xf]
        %v888 = vld [vmem:[#allocation8 + $0x18] sm:$0xf]
        %v889 = vld [vmem:[#allocation8 + $0x1c] sm:$0xf]
        %v890 = vld [vmem:[#allocation8 + $0x20] sm:$0xf]
        %v891 = vld [vmem:[#allocation8 + $0x24] sm:$0xf]
        %v892 = vld [vmem:[#allocation8 + $0x28] sm:$0xf]
        %v893 = vld [vmem:[#allocation8 + $0x2c] sm:$0xf]
        %v894 = vld [vmem:[#allocation8 + $0x30] sm:$0xf]
        %v895 = vld [vmem:[#allocation8 + $0x34] sm:$0xf]
        %v896 = vld [vmem:[#allocation8 + $0x38] sm:$0xf]
        %v897 = vld [vmem:[#allocation8 + $0x3c] sm:$0xf]
        %v898 = vld [vmem:[%s5] sm:$0x1]
        %v900 = vlaneseq
        %v901 = vshrl.u32 %v900, 7
        %v902 = vsub.s32 0, %v901
        %v903 = vrot.slane %v898, %v902
        %v921 = vunpack.c.l.b16 %v882
        %v922 = vunpack.c.l.b16 %v883
        %v923 = vunpack.c.l.b16 %v884
        %v924 = vunpack.c.l.b16 %v885
        %v925 = vunpack.c.l.b16 %v886
        %v926 = vunpack.c.l.b16 %v887
        %v927 = vunpack.c.l.b16 %v888
        %v928 = vunpack.c.l.b16 %v889
        %v929 = vunpack.c.l.b16 %v890
        %v930 = vunpack.c.l.b16 %v891
        %v931 = vunpack.c.l.b16 %v892
        %v932 = vunpack.c.l.b16 %v893
        %v933 = vunpack.c.l.b16 %v894
        %v934 = vunpack.c.l.b16 %v895
        %v935 = vunpack.c.l.b16 %v896
        %v936 = vunpack.c.l.b16 %v897
        %v937 = vpack.c.b16 %v922, %v921
        %v938 = vpack.c.b16 %v924, %v923
        %v939 = vpack.c.b16 %v926, %v925
        %v940 = vpack.c.b16 %v928, %v927
        %v941 = vpack.c.b16 %v930, %v929
        %v942 = vpack.c.b16 %v932, %v931
        %v943 = vpack.c.b16 %v934, %v933
        %v944 = vpack.c.b16 %v936, %v935
        %953 = vmatprep.subr.bf16.mxu0 0
        %954 = vmatpush1.bf16.msra.mxu0 %v937
        %955 = vmatprep.subr.bf16.mxu0 0
        %956 = vmatpush1.bf16.msra.mxu0 %v938
        %957 = vmatprep.subr.bf16.mxu0 0
        %958 = vmatpush1.bf16.msra.mxu0 %v939
        %959 = vmatprep.subr.bf16.mxu0 0
        %960 = vmatpush1.bf16.msra.mxu0 %v940
        %961 = vmatprep.subr.bf16.mxu0 0
        %962 = vmatpush1.bf16.msra.mxu0 %v941
        %963 = vmatprep.subr.bf16.mxu0 0
        %964 = vmatpush1.bf16.msra.mxu0 %v942
        %965 = vmatprep.subr.bf16.mxu0 0
        %966 = vmatpush1.bf16.msra.mxu0 %v943
        %967 = vmatprep.subr.bf16.mxu0 0
        %968 = vmatpush1.bf16.msra.mxu0 %v944
        %969 = vmatprep.subr.bf16.mxu0 0
        %970 = vmatpush1.bf16.msra.mxu0 0
        %971 = vmatprep.subr.bf16.mxu0 0
        %972 = vmatpush1.bf16.msra.mxu0 0
        %973 = vmatprep.subr.bf16.mxu0 0
        %974 = vmatpush1.bf16.msra.mxu0 0
        %975 = vmatprep.subr.bf16.mxu0 0
        %976 = vmatpush1.bf16.msra.mxu0 0
        %977 = vmatprep.subr.bf16.mxu0 0
        %978 = vmatpush1.bf16.msra.mxu0 0
        %979 = vmatprep.subr.bf16.mxu0 0
        %980 = vmatpush1.bf16.msra.mxu0 0
        %981 = vmatprep.subr.bf16.mxu0 0
        %982 = vmatpush1.bf16.msra.mxu0 0
        %983 = vmatprep.subr.bf16.mxu0 0
        %984 = vmatpush1.bf16.msra.mxu0 0
        %985 = vmatprep.mubr.bf16.mxu0 0
        %986 = vmatmul.mubr.bf16.gmra.mrb[0].mxu0 %v875
        %v987 = vpop.f32.mrb[0].mxu0
        %v988 = vadd.f32 %v903, %v987
        %v989 = vpop.f32.mrb[0].mxu0
        %v990 = vpop.f32.mrb[0].mxu0
        %v991 = vadd.f32 %v903, %v990
        %v992 = vpop.f32.mrb[0].mxu0
        %993 = vmatprep.mubr.bf16.mxu0 0
        %994 = vmatmul.mubr.bf16.gmra.mrb[0].mxu0 %v876
        %v995 = vpop.f32.mrb[0].mxu0
        %v996 = vadd.f32 %v903, %v995
        %v997 = vpop.f32.mrb[0].mxu0
        %v998 = vpop.f32.mrb[0].mxu0
        %v999 = vadd.f32 %v903, %v998
        %v1000 = vpop.f32.mrb[0].mxu0
        %1001 = vmatprep.mubr.bf16.mxu0 0
        %1002 = vmatmul.mubr.bf16.gmra.mrb[0].mxu0 %v877
        %v1003 = vpop.f32.mrb[0].mxu0
        %v1004 = vadd.f32 %v903, %v1003
        %v1005 = vpop.f32.mrb[0].mxu0
        %v1006 = vpop.f32.mrb[0].mxu0
        %v1007 = vadd.f32 %v903, %v1006
        %v1008 = vpop.f32.mrb[0].mxu0
        %1009 = vmatprep.mubr.bf16.mxu0 0
        %1010 = vmatmul.mubr.bf16.gmra.mrb[0].mxu0 %v878
        %v1011 = vpop.f32.mrb[0].mxu0
        %v1012 = vadd.f32 %v903, %v1011
        %v1013 = vpop.f32.mrb[0].mxu0
        %v1014 = vpop.f32.mrb[0].mxu0
        %v1015 = vadd.f32 %v903, %v1014
        %v1016 = vpop.f32.mrb[0].mxu0
        %1017 = vmatprep.mubr.bf16.mxu0 0
        %1018 = vmatmul.mubr.bf16.gmra.mrb[0].mxu0 %v879
        %v1019 = vpop.f32.mrb[0].mxu0
        %v1020 = vadd.f32 %v903, %v1019
        %v1021 = vpop.f32.mrb[0].mxu0
        %v1022 = vpop.f32.mrb[0].mxu0
        %v1023 = vadd.f32 %v903, %v1022
        %v1024 = vpop.f32.mrb[0].mxu0
        %1025 = vmatprep.mubr.bf16.mxu0 0
        %1026 = vmatmul.mubr.bf16.gmra.mrb[0].mxu0 %v880
        %v1027 = vpop.f32.mrb[0].mxu0
        %v1028 = vadd.f32 %v903, %v1027
        %v1029 = vpop.f32.mrb[0].mxu0
        %v1030 = vpop.f32.mrb[0].mxu0
        %v1031 = vadd.f32 %v903, %v1030
        %v1032 = vpop.f32.mrb[0].mxu0
        %1033 = vmatprep.mubr.bf16.mxu0 0
        %1034 = vmatmul.mubr.bf16.gmra.mrb[0].mxu0 %v881
        %v1035 = vpop.f32.mrb[0].mxu0
        %v1036 = vadd.f32 %v903, %v1035
        %v1037 = vpop.f32.mrb[0].mxu0
        %v1038 = vpop.f32.mrb[0].mxu0
        %v1039 = vpop.f32.mrb[0].mxu0
        %1040 = vdwg.mxu0
        %v1041 = vmax.f32 %v988, 0.0
        %v1042 = vmax.f32 %v991, 0.0
        %v1043 = vmax.f32 %v996, 0.0
        %v1044 = vmax.f32 %v999, 0.0
        %v1045 = vmax.f32 %v1004, 0.0
        %v1046 = vmax.f32 %v1007, 0.0
        %v1047 = vmax.f32 %v1012, 0.0
        %v1048 = vmax.f32 %v1015, 0.0
        %v1049 = vmax.f32 %v1020, 0.0
        %v1050 = vmax.f32 %v1023, 0.0
        %v1051 = vmax.f32 %v1028, 0.0
        %v1052 = vmax.f32 %v1031, 0.0
        %v1053 = vmax.f32 %v1036, 0.0
        %v1054 = vld [vmem:[%s423] sm:$0xf]
        %v1055 = vld [vmem:[%s423 + $0x4] sm:$0xf]
        %v1056 = vld [vmem:[%s423 + $0x8] sm:$0xf]
        %v1057 = vld [vmem:[%s423 + $0xc] sm:$0xf]
        %v1058 = vld [vmem:[%s423 + $0x10] sm:$0xf]
        %v1059 = vld [vmem:[%s423 + $0x14] sm:$0xf]
        %v1060 = vld [vmem:[%s423 + $0x18] sm:$0xf]
        %v1061 = vld [vmem:[%s423 + $0x1c] sm:$0xf]
        %v1062 = vld [vmem:[%s423 + $0x20] sm:$0xf]
        %v1063 = vld [vmem:[%s423 + $0x24] sm:$0xf]
        %v1064 = vld [vmem:[%s423 + $0x28] sm:$0xf]
        %v1065 = vld [vmem:[%s423 + $0x2c] sm:$0xf]
        %v1066 = vld [vmem:[%s423 + $0x30] sm:$0xf]
        %vm1067 = vcmp.gt.bf16.partialorder %v1054, 1056980736
        %vm1068 = vcmp.gt.bf16.partialorder %v1055, 1056980736
        %vm1069 = vcmp.gt.bf16.partialorder %v1056, 1056980736
        %vm1070 = vcmp.gt.bf16.partialorder %v1057, 1056980736
        %vm1071 = vcmp.gt.bf16.partialorder %v1058, 1056980736
        %vm1072 = vcmp.gt.bf16.partialorder %v1059, 1056980736
        %vm1073 = vcmp.gt.bf16.partialorder %v1060, 1056980736
        %vm1074 = vcmp.gt.bf16.partialorder %v1061, 1056980736
        %vm1075 = vcmp.gt.bf16.partialorder %v1062, 1056980736
        %vm1076 = vcmp.gt.bf16.partialorder %v1063, 1056980736
        %vm1077 = vcmp.gt.bf16.partialorder %v1064, 1056980736
        %vm1078 = vcmp.gt.bf16.partialorder %v1065, 1056980736
        %vm1079 = vcmp.gt.bf16.partialorder %v1066, 1056980736
        %v1080 = vsel %vm1067, 65537, 0
        %v1081 = vsel %vm1068, 65537, 0
        %v1082 = vsel %vm1069, 65537, 0
        %v1083 = vsel %vm1070, 65537, 0
        %v1084 = vsel %vm1071, 65537, 0
        %v1085 = vsel %vm1072, 65537, 0
        %v1086 = vsel %vm1073, 65537, 0
        %v1087 = vsel %vm1074, 65537, 0
        %v1088 = vsel %vm1075, 65537, 0
        %v1089 = vsel %vm1076, 65537, 0
        %v1090 = vsel %vm1077, 65537, 0
        %v1091 = vsel %vm1078, 65537, 0
        %v1092 = vsel %vm1079, 65537, 0
        %v1093 = vunpack.c.l.b16 %v1080
        %v1094 = vunpack.c.l.b16 %v1081
        %v1095 = vunpack.c.l.b16 %v1082
        %v1096 = vunpack.c.l.b16 %v1083
        %v1097 = vunpack.c.l.b16 %v1084
        %v1098 = vunpack.c.l.b16 %v1085
        %v1099 = vunpack.c.l.b16 %v1086
        %v1100 = vunpack.c.l.b16 %v1087
        %v1101 = vunpack.c.l.b16 %v1088
        %v1102 = vunpack.c.l.b16 %v1089
        %v1103 = vunpack.c.l.b16 %v1090
        %v1104 = vunpack.c.l.b16 %v1091
        %v1105 = vunpack.c.l.b16 %v1092
        %vm1106 = vcmp.ne.s32.totalorder %v1093, 0
        %vm1107 = vcmp.ne.s32.totalorder %v1094, 0
        %vm1108 = vcmp.ne.s32.totalorder %v1095, 0
        %vm1109 = vcmp.ne.s32.totalorder %v1096, 0
        %vm1110 = vcmp.ne.s32.totalorder %v1097, 0
        %vm1111 = vcmp.ne.s32.totalorder %v1098, 0
        %vm1112 = vcmp.ne.s32.totalorder %v1099, 0
        %vm1113 = vcmp.ne.s32.totalorder %v1100, 0
        %vm1114 = vcmp.ne.s32.totalorder %v1101, 0
        %vm1115 = vcmp.ne.s32.totalorder %v1102, 0
        %vm1116 = vcmp.ne.s32.totalorder %v1103, 0
        %vm1117 = vcmp.ne.s32.totalorder %v1104, 0
        %vm1118 = vcmp.ne.s32.totalorder %v1105, 0
        %v1119 = vsel %vm1106, %v1041, 0.0
        %v1120 = vsel %vm1107, %v1042, 0.0
        %v1121 = vsel %vm1108, %v1043, 0.0
        %v1122 = vsel %vm1109, %v1044, 0.0
        %v1123 = vsel %vm1110, %v1045, 0.0
        %v1124 = vsel %vm1111, %v1046, 0.0
        %v1125 = vsel %vm1112, %v1047, 0.0
        %v1126 = vsel %vm1113, %v1048, 0.0
        %v1127 = vsel %vm1114, %v1049, 0.0
        %v1128 = vsel %vm1115, %v1050, 0.0
        %v1129 = vsel %vm1116, %v1051, 0.0
        %v1130 = vsel %vm1117, %v1052, 0.0
        %v1131 = vsel %vm1118, %v1053, 0.0
        %v1132 = vpack.c.bf16 %v1120, %v1119
        %v1133 = vpack.c.bf16 %v1122, %v1121
        %v1134 = vpack.c.bf16 %v1124, %v1123
        %v1135 = vpack.c.bf16 %v1126, %v1125
        %v1136 = vpack.c.bf16 %v1128, %v1127
        %v1137 = vpack.c.bf16 %v1130, %v1129
        %v1138 = vpack.c.bf16 %v1131, %v1131
        %v1139 = vld [vmem:[#allocation11] sm:$0xf]
        %v1140 = vld [vmem:[#allocation11 + $0x4] sm:$0xf]
        %v1141 = vld [vmem:[#allocation11 + $0x8] sm:$0xf]
        %v1142 = vld [vmem:[#allocation11 + $0xc] sm:$0xf]
        %v1143 = vld [vmem:[#allocation11 + $0x10] sm:$0xf]
        %v1144 = vld [vmem:[#allocation11 + $0x14] sm:$0xf]
        %v1145 = vld [vmem:[#allocation11 + $0x18] sm:$0xf]
        %v1146 = vld [vmem:[#allocation11 + $0x1c] sm:$0xf]
        %v1147 = vld [vmem:[#allocation11 + $0x20] sm:$0xf]
        %v1148 = vld [vmem:[#allocation11 + $0x24] sm:$0xf]
        %v1149 = vld [vmem:[#allocation11 + $0x28] sm:$0xf]
        %v1150 = vld [vmem:[#allocation11 + $0x2c] sm:$0xf]
        %v1151 = vld [vmem:[#allocation11 + $0x30] sm:$0xf]
        %v1152 = vld [vmem:[#allocation11 + $0x34] sm:$0xf]
        %v1153 = vld [vmem:[#allocation11 + $0x38] sm:$0xf]
        %v1154 = vld [vmem:[#allocation11 + $0x3c] sm:$0xf]
        %v1155 = vld [vmem:[%s8] sm:$0x1]
        %v1157 = vlaneseq
        %v1158 = vshrl.u32 %v1157, 7
        %v1159 = vsub.s32 0, %v1158
        %v1160 = vrot.slane %v1155, %v1159
        %v1178 = vunpack.c.l.b16 %v1139
        %v1179 = vunpack.c.l.b16 %v1140
        %v1180 = vunpack.c.l.b16 %v1141
        %v1181 = vunpack.c.l.b16 %v1142
        %v1182 = vunpack.c.l.b16 %v1143
        %v1183 = vunpack.c.l.b16 %v1144
        %v1184 = vunpack.c.l.b16 %v1145
        %v1185 = vunpack.c.l.b16 %v1146
        %v1186 = vunpack.c.l.b16 %v1147
        %v1187 = vunpack.c.l.b16 %v1148
        %v1188 = vunpack.c.l.b16 %v1149
        %v1189 = vunpack.c.l.b16 %v1150
        %v1190 = vunpack.c.l.b16 %v1151
        %v1191 = vunpack.c.l.b16 %v1152
        %v1192 = vunpack.c.l.b16 %v1153
        %v1193 = vunpack.c.l.b16 %v1154
        %v1194 = vpack.c.b16 %v1179, %v1178
        %v1195 = vpack.c.b16 %v1181, %v1180
        %v1196 = vpack.c.b16 %v1183, %v1182
        %v1197 = vpack.c.b16 %v1185, %v1184
        %v1198 = vpack.c.b16 %v1187, %v1186
        %v1199 = vpack.c.b16 %v1189, %v1188
        %v1200 = vpack.c.b16 %v1191, %v1190
        %v1201 = vpack.c.b16 %v1193, %v1192
        %1210 = vmatprep.subr.bf16.mxu0 0
        %1211 = vmatpush1.bf16.msra.mxu0 %v1194
        %1212 = vmatprep.subr.bf16.mxu0 0
        %1213 = vmatpush1.bf16.msra.mxu0 %v1195
        %1214 = vmatprep.subr.bf16.mxu0 0
        %1215 = vmatpush1.bf16.msra.mxu0 %v1196
        %1216 = vmatprep.subr.bf16.mxu0 0
        %1217 = vmatpush1.bf16.msra.mxu0 %v1197
        %1218 = vmatprep.subr.bf16.mxu0 0
        %1219 = vmatpush1.bf16.msra.mxu0 %v1198
        %1220 = vmatprep.subr.bf16.mxu0 0
        %1221 = vmatpush1.bf16.msra.mxu0 %v1199
        %1222 = vmatprep.subr.bf16.mxu0 0
        %1223 = vmatpush1.bf16.msra.mxu0 %v1200
        %1224 = vmatprep.subr.bf16.mxu0 0
        %1225 = vmatpush1.bf16.msra.mxu0 %v1201
        %1226 = vmatprep.subr.bf16.mxu0 0
        %1227 = vmatpush1.bf16.msra.mxu0 0
        %1228 = vmatprep.subr.bf16.mxu0 0
        %1229 = vmatpush1.bf16.msra.mxu0 0
        %1230 = vmatprep.subr.bf16.mxu0 0
        %1231 = vmatpush1.bf16.msra.mxu0 0
        %1232 = vmatprep.subr.bf16.mxu0 0
        %1233 = vmatpush1.bf16.msra.mxu0 0
        %1234 = vmatprep.subr.bf16.mxu0 0
        %1235 = vmatpush1.bf16.msra.mxu0 0
        %1236 = vmatprep.subr.bf16.mxu0 0
        %1237 = vmatpush1.bf16.msra.mxu0 0
        %1238 = vmatprep.subr.bf16.mxu0 0
        %1239 = vmatpush1.bf16.msra.mxu0 0
        %1240 = vmatprep.subr.bf16.mxu0 0
        %1241 = vmatpush1.bf16.msra.mxu0 0
        %1242 = vmatprep.mubr.bf16.mxu0 0
        %1243 = vmatmul.mubr.bf16.gmra.mrb[0].mxu0 %v1132
        %v1244 = vpop.f32.mrb[0].mxu0
        %v1245 = vadd.f32 %v1160, %v1244
        %v1246 = vpop.f32.mrb[0].mxu0
        %v1247 = vpop.f32.mrb[0].mxu0
        %v1248 = vadd.f32 %v1160, %v1247
        %v1249 = vpop.f32.mrb[0].mxu0
        %1250 = vmatprep.mubr.bf16.mxu0 0
        %1251 = vmatmul.mubr.bf16.gmra.mrb[0].mxu0 %v1133
        %v1252 = vpop.f32.mrb[0].mxu0
        %v1253 = vadd.f32 %v1160, %v1252
        %v1254 = vpop.f32.mrb[0].mxu0
        %v1255 = vpop.f32.mrb[0].mxu0
        %v1256 = vadd.f32 %v1160, %v1255
        %v1257 = vpop.f32.mrb[0].mxu0
        %1258 = vmatprep.mubr.bf16.mxu0 0
        %1259 = vmatmul.mubr.bf16.gmra.mrb[0].mxu0 %v1134
        %v1260 = vpop.f32.mrb[0].mxu0
        %v1261 = vadd.f32 %v1160, %v1260
        %v1262 = vpop.f32.mrb[0].mxu0
        %v1263 = vpop.f32.mrb[0].mxu0
        %v1264 = vadd.f32 %v1160, %v1263
        %v1265 = vpop.f32.mrb[0].mxu0
        %1266 = vmatprep.mubr.bf16.mxu0 0
        %1267 = vmatmul.mubr.bf16.gmra.mrb[0].mxu0 %v1135
        %v1268 = vpop.f32.mrb[0].mxu0
        %v1269 = vadd.f32 %v1160, %v1268
        %v1270 = vpop.f32.mrb[0].mxu0
        %v1271 = vpop.f32.mrb[0].mxu0
        %v1272 = vadd.f32 %v1160, %v1271
        %v1273 = vpop.f32.mrb[0].mxu0
        %1274 = vmatprep.mubr.bf16.mxu0 0
        %1275 = vmatmul.mubr.bf16.gmra.mrb[0].mxu0 %v1136
        %v1276 = vpop.f32.mrb[0].mxu0
        %v1277 = vadd.f32 %v1160, %v1276
        %v1278 = vpop.f32.mrb[0].mxu0
        %v1279 = vpop.f32.mrb[0].mxu0
        %v1280 = vadd.f32 %v1160, %v1279
        %v1281 = vpop.f32.mrb[0].mxu0
        %1282 = vmatprep.mubr.bf16.mxu0 0
        %1283 = vmatmul.mubr.bf16.gmra.mrb[0].mxu0 %v1137
        %v1284 = vpop.f32.mrb[0].mxu0
        %v1285 = vadd.f32 %v1160, %v1284
        %v1286 = vpop.f32.mrb[0].mxu0
        %v1287 = vpop.f32.mrb[0].mxu0
        %v1288 = vadd.f32 %v1160, %v1287
        %v1289 = vpop.f32.mrb[0].mxu0
        %1290 = vmatprep.mubr.bf16.mxu0 0
        %1291 = vmatmul.mubr.bf16.gmra.mrb[0].mxu0 %v1138
        %v1292 = vpop.f32.mrb[0].mxu0
        %v1293 = vadd.f32 %v1160, %v1292
        %v1294 = vpop.f32.mrb[0].mxu0
        %v1295 = vpop.f32.mrb[0].mxu0
        %v1296 = vpop.f32.mrb[0].mxu0
        %1297 = vdwg.mxu0
        %1298 = vst [vmem:[%s471] sm:$0xff] %v1245
        %1299 = vst [vmem:[%s471 + $0x8] sm:$0xff] %v1248
        %1300 = vst [vmem:[%s471 + $0x10] sm:$0xff] %v1253
        %1301 = vst [vmem:[%s471 + $0x18] sm:$0xff] %v1256
        %1302 = vst [vmem:[%s471 + $0x20] sm:$0xff] %v1261
        %1303 = vst [vmem:[%s471 + $0x28] sm:$0xff] %v1264
        %1304 = vst [vmem:[%s471 + $0x30] sm:$0xff] %v1269
        %1305 = vst [vmem:[%s471 + $0x38] sm:$0xff] %v1272
        %1306 = vst [vmem:[%s471 + $0x40] sm:$0xff] %v1277
        %1307 = vst [vmem:[%s471 + $0x48] sm:$0xff] %v1280
        %1308 = vst [vmem:[%s471 + $0x50] sm:$0xff] %v1285
        %1309 = vst [vmem:[%s471 + $0x58] sm:$0xff] %v1288
        %1310 = vst [vmem:[%s471 + $0x60] sm:$0xff] %v1293
        %s1311 = sand.u32 %s242, 1
        %s1312 = scalar_lea.sflag [#allocation4], %s1311
        %s1313 = sand.u32 %s242, 1
        %s1314 = smul.addr %s1313, 104
        %s1315 = scalar_lea.vmem [#allocation12], %s1314
        // Predicated region
        $region81: #{tpu_custom_call.1} parent=55 // pred_check
          %p1316 = pneg %p252
        $region82: #{tpu_custom_call.1} parent=55 // pred_check_branch
          %1318 = sbr.rel (%p1316) target = $region84
        $region83: #{tpu_custom_call.1} parent=55 // pred_region
          %s1319 = smul.u32 13, %s30
          %s1321 = ssub.s32 1664, 1664
          %1322 = vsyncadd %s1312, %s1321
          %s1323 = smul.addr %s1319, 128
          %s1324 = scalar_lea.hbm %s9, %s1323
          %s1325 = sshll.u32 %s1315, 4
          %s1326 = int_to_ptr.vmem [resolvable:$true] %s1325
          %1331 = dma.vmem_to_hbm [thread:$0]  %s1326, 1664, %s1324, %s1312, 128, 128, 8
        $region84: #{tpu_custom_call.1} parent=55 // pred_fallthru
          _
      $region56: #{tpu_custom_call.1} parent=5 // pred_fallthru
        _
      %p1332 = scmp.le.s32.totalorder 2, %s25
      // Predicated region
      $region85: #{tpu_custom_call.1} parent=5 // pred_check
        %p1333 = pneg %p1332
      $region86: #{tpu_custom_call.1} parent=5 // pred_check_branch
        %1335 = sbr.rel (%p1333) target = $region88
      $region87: #{tpu_custom_call.1} parent=5 // pred_region
        %s1336 = ssub.s32 %s25, 2
        // Predicated region
        $region89: #{tpu_custom_call.1} parent=87 // pred_check
          %p1337 = pneg %p258
        $region90: #{tpu_custom_call.1} parent=87 // pred_check_branch
          %1339 = sbr.rel (%p1337) target = $region92
        $region91: #{tpu_custom_call.1} parent=87 // pred_region
          %s1340 = sand.u32 %s243, 1
          %s1341 = scalar_lea.sflag [#allocation4], %s1340
          %s1342 = sand.u32 %s243, 1
          %s1343 = smul.addr %s1342, 104
          %s1344 = scalar_lea.vmem [#allocation12], %s1343
          %1345 = dma.done %s1341, 1664
        $region92: #{tpu_custom_call.1} parent=87 // pred_fallthru
          _
      $region88: #{tpu_custom_call.1} parent=5 // pred_fallthru
        _
    $region6: #{tpu_custom_call.1} parent=1 // loop_footer
      %s29 = sadd.s32 1, %s25
    $region7: #{tpu_custom_call.1} parent=1 // loop_footer_branch
      %24 = sbr.rel target = $region3
    $region8: #{tpu_custom_call.1} parent=1 // loop_exit
      _
    %1346 = vsyncpa [#allocation3], 1
    %s1347 = scalar_lea.sflag [#allocation3], 1
    %1348 = vsyncpa %s1347, 1
    %1349 = vsyncpa [#allocation6], 1
    %1350 = vsyncpa [#allocation10], 1
    %s1351 = scalar_lea.sflag [#allocation10], 1
    %1352 = vsyncpa %s1351, 1
    %1353 = vsyncpa [#allocation4], 1
    %s1354 = scalar_lea.sflag [#allocation4], 1
    %1355 = vsyncpa %s1354, 1

</llo_original>
